<compile_context>
chip_gen: v7x
topology: tpu7x:2x2x1
jax: 0.10.0
libtpu: 0.0.40
codegen_flags: <defaults>
</compile_context>

<pallas_src>
import math

import numpy as np
import jax
import jax.numpy as jnp
from jax import lax
from jax.experimental import pallas as pl
from jax.experimental.pallas import tpu as pltpu

OUT_H, OUT_W = 224, 224

# Max images per grid step: double-buffered output = 2*32*224*224*4 B ~ 12.8 MiB,
# + (TB*8, 224) f32 scratch (~0.23 MiB) + tiny input/weight buffers -> ~13.1 MiB,
# under the default scoped-VMEM limit on v5e (16 MiB) and v6e/v7x (32 MiB).
TB_MAX = 32


def _interp_matrix_np(out_size: int, in_size: int) -> np.ndarray:
    """PyTorch bilinear (align_corners=False) resampling as a dense (out, in) matrix.

    Built with numpy at trace time so it becomes a baked constant.
    """
    scale = in_size / out_size
    dst = np.arange(out_size, dtype=np.float32)
    src = (dst + 0.5) * scale - 0.5
    src = np.maximum(src, 0.0)                                   # PyTorch clamps src >= 0
    i0 = np.clip(np.floor(src).astype(np.int64), 0, in_size - 1)
    i1 = np.minimum(i0 + 1, in_size - 1)
    lam = (src - i0).astype(np.float32)
    w = np.zeros((out_size, in_size), np.float32)
    rows = np.arange(out_size)
    np.add.at(w, (rows, i0), 1.0 - lam)
    np.add.at(w, (rows, i1), lam)
    return w


def _make_kernel(tb: int, p: int):
    """Kernel over a block of `tb` images, each padded to (p, p)."""

    def kernel(img_ref, wh_ref, wwt_ref, o_ref, tmp_ref):
        # img_ref : (tb, p, p)     padded square input images
        # wh_ref  : (224, p)       row-interpolation matrix (zero-padded cols)
        # wwt_ref : (p, 224)       transposed column-interpolation matrix
        # o_ref   : (tb, 224, 224)
        # tmp_ref : (tb*p, 224)    VMEM scratch, lane-dense intermediate

        # Stage 1: column interpolation for all tb images at once.
        # Collapsing the leading dims is layout-free (last dim unchanged).
        img2d = img_ref[...].reshape(tb * p, p)
        tmp_ref[...] = jnp.dot(img2d, wwt_ref[...],
                               preferred_element_type=jnp.float32)

        # Stage 2: row interpolation per image, written straight to the output
        # block.  fori_loop (not a Python for) bounds live ranges so large tb
        # does not spill the 64-vreg budget; small unroll keeps LLO visibility.
        def body(b, carry):
            start = pl.multiple_of(b * p, p)          # p is a multiple of 8
            t = tmp_ref[pl.ds(start, p), :]           # (p, 224)
            o_ref[b] = jnp.dot(wh_ref[...], t,
                               preferred_element_type=jnp.float32
                               ).astype(o_ref.dtype)
            return carry

        lax.fori_loop(0, tb, body, 0, unroll=(2 if tb >= 2 else 1))

    return kernel


def bilinear_imputation_forward(batch_x: jnp.ndarray, W: jnp.ndarray) -> jnp.ndarray:
    """batch_x: (B, F) float32, W: (F,) float32 parameter (init = arange(F))."""
    B, F = batch_x.shape
    in_dim = math.ceil(math.sqrt(F))
    target = in_dim * in_dim

    # construct_indices + torch.take: per-row gather of columns by clamp(int64(W), 0, 29)
    # (upper bound 29 is hardcoded in the original module; min(29, F-1) keeps
    # jnp.take's silent clamp from diverging when F < 30).
    # TODO(synk): assumes construct_indices adds the per-row offsets needed by
    # torch.take's flat indexing (i.e. a per-row column gather).
    idx = jnp.clip(W.astype(jnp.int32), 0, min(29, F - 1))
    taken = jnp.take(batch_x, idx, axis=1)                                   # (B, F)
    # TODO(synk): the in-place `batchX.data.copy_(taken)` side effect is not
    # reproduced (it does not affect the returned value).

    # Spatial pad to a sublane multiple; exact because the padded weight
    # columns/rows in Wh/Ww^T are zero.  XLA fuses the pads/reshape with the
    # gather into a single tiny producer op (~B*0.5 KB of HBM traffic).
    P = max(8, ((in_dim + 7) // 8) * 8)
    img = jnp.pad(taken, ((0, 0), (0, target - F))).reshape(B, in_dim, in_dim)
    img = jnp.pad(img, ((0, 0), (0, P - in_dim), (0, P - in_dim)))           # (B, P, P)
    img = img.astype(jnp.float32)

    # Interpolation matrices as baked constants (numpy at trace time).
    wh_np = _interp_matrix_np(OUT_H, in_dim)                                 # (224, inDim)
    ww_np = _interp_matrix_np(OUT_W, in_dim)                                 # (224, inDim)
    wh_p = jnp.asarray(np.pad(wh_np, ((0, 0), (0, P - in_dim))))             # (224, P)
    wwt_p = jnp.asarray(np.ascontiguousarray(
        np.pad(ww_np, ((0, 0), (0, P - in_dim))).T))                         # (P, 224)

    # Batch TB images per grid step.  TB <= 32 keeps the double-buffered
    # output under every generation's default scoped VMEM; the grid length is
    # kept even (when B >= 2) so v7x's two TensorCores get equal work.
    if B <= 1:
        tb = 1
    else:
        n_steps = max(2, pl.cdiv(B, TB_MAX))
        n_steps += n_steps % 2
        tb = pl.cdiv(B, n_steps)
    grid = (pl.cdiv(B, tb),)          # partial last block handled by Pallas masking

    flops = 2 * B * (P * P * OUT_W + OUT_H * P * OUT_W)
    bytes_accessed = 4 * (B * P * P + OUT_H * P + P * OUT_W + B * OUT_H * OUT_W)

    out = pl.pallas_call(
        _make_kernel(tb, P),
        out_shape=jax.ShapeDtypeStruct((B, OUT_H, OUT_W), jnp.float32),
        grid_spec=pltpu.PrefetchScalarGridSpec(
            num_scalar_prefetch=0,
            grid=grid,
            in_specs=[
                pl.BlockSpec((tb, P, P), lambda i: (i, 0, 0)),
                pl.BlockSpec((OUT_H, P), lambda i: (0, 0)),
                pl.BlockSpec((P, OUT_W), lambda i: (0, 0)),
            ],
            out_specs=pl.BlockSpec((tb, OUT_H, OUT_W), lambda i: (i, 0, 0)),
            scratch_shapes=[pltpu.VMEM((tb * P, OUT_W), jnp.float32)],
        ),
        compiler_params=pltpu.CompilerParams(
            dimension_semantics=("parallel",),
            vmem_limit_bytes=32 * 1024 * 1024,
        ),
        cost_estimate=pl.CostEstimate(
            flops=flops, transcendentals=0, bytes_accessed=bytes_accessed),
    )(img, wh_p, wwt_p)

    # Free (metadata-only) reshape to the module's output shape.
    return out.reshape(B, 1, OUT_H, OUT_W)


if __name__ == "__main__":
    key = jax.random.PRNGKey(0)
    B, F = 2, 30                       # F=30 matches the module's hardcoded clamp(..., 0, 29)
    x = jax.random.normal(key, (B, F), dtype=jnp.float32)
    # Deterministic parameter init, per __init__: W = arange(0, X.shape[1]) float32
    W = jnp.arange(F, dtype=jnp.float32)

    out = bilinear_imputation_forward(x, W)
    jax.block_until_ready(out)
    assert out.shape == (B, 1, OUT_H, OUT_W), out.shape
    assert out.dtype == jnp.float32

    # Light correctness sanity check against the same separable formulation in
    # plain JAX (loose tolerance: MXU vs XLA f32 matmul passes differ slightly).
    in_dim = math.ceil(math.sqrt(F))
    P = max(8, ((in_dim + 7) // 8) * 8)
    idx = jnp.clip(W.astype(jnp.int32), 0, min(29, F - 1))
    taken = jnp.take(x, idx, axis=1)
    img = jnp.pad(taken, ((0, 0), (0, in_dim * in_dim - F))).reshape(B, in_dim, in_dim)
    wh = jnp.asarray(_interp_matrix_np(OUT_H, in_dim))
    ww = jnp.asarray(_interp_matrix_np(OUT_W, in_dim))
    ref = jnp.einsum('hr,brc,wc->bhw', wh, img, ww)[:, None]
    np.testing.assert_allclose(np.asarray(out), np.asarray(ref), rtol=5e-2, atol=5e-2)

    print("KERNEL_OK")
</pallas_src>

<mosaic_0001>
module attributes {stable_mosaic.version = 11 : i64} {
  func.func @kernel(%arg0: i32, %arg1: memref<1x8x8xf32, #tpu.memory_space<vmem>>, %arg2: memref<224x8xf32, #tpu.memory_space<vmem>>, %arg3: memref<8x224xf32, #tpu.memory_space<vmem>>, %arg4: memref<1x224x224xf32, #tpu.memory_space<vmem>>, %arg5: memref<8x224xf32, #tpu.memory_space<vmem>>) attributes {dimension_semantics = [#tpu.dimension_semantics<parallel>], iteration_bounds = array<i64: 2>, scalar_prefetch = 0 : i64, scratch_operands = 1 : i64, tpu.core_type = #tpu.core_type<tc>, window_params = [{transform_indices = @transform_0, window_bounds = array<i64: 1, 8, 8>}, {pipeline_mode = #tpu.pipeline_mode<synchronous>, transform_indices = @transform_1, window_bounds = array<i64: 224, 8>}, {pipeline_mode = #tpu.pipeline_mode<synchronous>, transform_indices = @transform_2, window_bounds = array<i64: 8, 224>}, {transform_indices = @transform_3, window_bounds = array<i64: 1, 224, 224>}]} {
    %c0 = arith.constant 0 : index
    %c0_0 = arith.constant 0 : index
    %c0_1 = arith.constant 0 : index
    %0 = vector.load %arg1[%c0, %c0_0, %c0_1] : memref<1x8x8xf32, #tpu.memory_space<vmem>>, vector<1x8x8xf32>
    %1 = vector.shape_cast %0 : vector<1x8x8xf32> to vector<8x8xf32>
    %c0_2 = arith.constant 0 : index
    %c0_3 = arith.constant 0 : index
    %2 = vector.load %arg3[%c0_2, %c0_3] : memref<8x224xf32, #tpu.memory_space<vmem>>, vector<8x224xf32>
    %cst = arith.constant dense<0.000000e+00> : vector<8x224xf32>
    %3 = tpu.matmul %1, %2, %cst {dimension_numbers = #tpu.dot_dimension_numbers<[1], [0], [0], [1], [0, 0, 1, 1], [], []>} : vector<8x8xf32>, vector<8x224xf32>, vector<8x224xf32> -> vector<8x224xf32>
    %c0_4 = arith.constant 0 : index
    %c0_5 = arith.constant 0 : index
    %4 = vector.load %arg5[%c0_4, %c0_5] : memref<8x224xf32, #tpu.memory_space<vmem>>, vector<8x224xf32>
    tpu.vector_store %arg5[%c0_4, %c0_5], %3 {strides = array<i32>} : memref<8x224xf32, #tpu.memory_space<vmem>>, vector<8x224xf32>,
    %c0_i32 = arith.constant 0 : i32
    %c8_i32 = arith.constant 8 : i32
    %5 = arith.muli %c0_i32, %c8_i32 : i32
    %6 = tpu.assume_multiple %5, 8 : i32
    %7 = arith.index_cast %6 : i32 to index
    %c0_6 = arith.constant 0 : index
    %8 = vector.load %arg5[%7, %c0_6] : memref<8x224xf32, #tpu.memory_space<vmem>>, vector<8x224xf32>
    %c0_7 = arith.constant 0 : index
    %c0_8 = arith.constant 0 : index
    %9 = vector.load %arg2[%c0_7, %c0_8] : memref<224x8xf32, #tpu.memory_space<vmem>>, vector<224x8xf32>
    %cst_9 = arith.constant dense<0.000000e+00> : vector<224x224xf32>
    %10 = tpu.matmul %9, %8, %cst_9 {dimension_numbers = #tpu.dot_dimension_numbers<[1], [0], [0], [1], [0, 0, 1, 1], [], []>} : vector<224x8xf32>, vector<8x224xf32>, vector<224x224xf32> -> vector<224x224xf32>
    %11 = arith.index_cast %c0_i32 : i32 to index
    %c0_10 = arith.constant 0 : index
    %c0_11 = arith.constant 0 : index
    %12 = vector.load %arg4[%11, %c0_10, %c0_11] : memref<1x224x224xf32, #tpu.memory_space<vmem>>, vector<1x224x224xf32>
    %13 = vector.shape_cast %12 : vector<1x224x224xf32> to vector<224x224xf32>
    %14 = vector.shape_cast %10 : vector<224x224xf32> to vector<1x224x224xf32>
    tpu.vector_store %arg4[%11, %c0_10, %c0_11], %14 {strides = array<i32>} : memref<1x224x224xf32, #tpu.memory_space<vmem>>, vector<1x224x224xf32>,
    %c1_i32 = arith.constant 1 : i32
    return
  }
  func.func @transform_0(%arg0: i32) -> (i32, i32, i32) {
    %c0_i32 = arith.constant 0 : i32
    %c0_i32_0 = arith.constant 0 : i32
    %c0_i32_1 = arith.constant 0 : i32
    return %arg0, %c0_i32, %c0_i32_0 : i32, i32, i32
  }
  func.func @transform_1(%arg0: i32) -> (i32, i32) {
    %c0_i32 = arith.constant 0 : i32
    %c0_i32_0 = arith.constant 0 : i32
    %c0_i32_1 = arith.constant 0 : i32
    return %c0_i32, %c0_i32_0 : i32, i32
  }
  func.func @transform_2(%arg0: i32) -> (i32, i32) {
    %c0_i32 = arith.constant 0 : i32
    %c0_i32_0 = arith.constant 0 : i32
    %c0_i32_1 = arith.constant 0 : i32
    return %c0_i32, %c0_i32_0 : i32, i32
  }
  func.func @transform_3(%arg0: i32) -> (i32, i32, i32) {
    %c0_i32 = arith.constant 0 : i32
    %c0_i32_0 = arith.constant 0 : i32
    %c0_i32_1 = arith.constant 0 : i32
    return %arg0, %c0_i32, %c0_i32_0 : i32, i32, i32
  }
}

</mosaic_0001>

<llo_original>
// kernel: tpu_custom_call.1
$region0: #{tpu_custom_call.1}
  #allocation0 [shape = 'u32[]', space=smem, size = 0x4, offset = 0x4, fixed_abs, tag = 'smem constant byte address 0x4 - core index']
  #allocation1 [shape = 'u32[144,128]{1,0:T(1,128)}', space=vmem, size = 0x12000, scoped, tag = 'internal scratch']
  #allocation2 [shape = 'f32[8,224]{1,0:T(8,128)}', space=vmem, size = 0x2000, scoped, tag = 'scratch operand']
  %s0 = inlined_call_operand.vmem [shape: f32[2,8,8], index: 0, kind: input, shape index: {}]
  %s1 = inlined_call_operand.vmem [shape: f32[224,8], index: 1, kind: input, shape index: {}]
  %s2 = inlined_call_operand.vmem [shape: f32[8,224], index: 2, kind: input, shape index: {}]
  %s3 = inlined_call_operand.hbm [shape: f32[2,224,224], index: 3, kind: output, shape index: {}]
  %s4 = sld [smem:[#allocation0]]
  $region45: #{tpu_custom_call.1} parent=0
    _
  %s6 = ssub.s32 1, %s4
  %s7 = scalar_select 0, %s6, %s4
  $region1: #{tpu_custom_call.1} parent=0
    #allocation3 [shape = 'u8[458752]{0}', space=vmem, size = 0x70000, scoped, tag = 'output window, operand 0']
    #allocation4 [shape = 's32[2]{0}', space=sflag, size = 0x8, scoped, tag = 'scoped memory for tpu_custom_call.1']
    %8 = vsyncpa [#allocation4], 0
    %s9 = scalar_lea.sflag [#allocation4], 1
    %10 = vsyncpa %s9, 0
    loop: start=0, step=1, limit=4
    $region2: #{tpu_custom_call.1} parent=1 // loop_pre_header
      _
    $region3: #{tpu_custom_call.1} parent=1 // loop_header
      %s12 = sphi 0, %s16
      %p13 = scmp.ge.s32.totalorder %s12, 4
      %s22 = sphi 0, %s24
      %s25 = sphi 0, %s22
      %s26 = sphi 0, %s25
      %s42 = sphi 0, %s26
      %s46 = sphi 0, %s46
      %s48 = sphi 0, %s46
      %s49 = sphi 0, %s48
      %s63 = sphi 0, %s49
      %s67 = sphi 0, %s67
      %s69 = sphi 0, %s67
      %s70 = sphi 0, %s69
      %s84 = sphi 0, %s70
      %s90 = sphi 0, %s92
      %s93 = sphi 0, %s90
      %s94 = sphi 0, %s93
      %s110 = sphi 0, %s94
    $region4: #{tpu_custom_call.1} parent=1 // loop_header_branch
      %15 = sbr.rel (%p13) target = $region8
    $region5: #{tpu_custom_call.1} parent=1 // loop_body
      %s17 = ssub.s32 %s12, 1
      %s18 = ssub.s32 %s12, 2
      %s19 = sadd.s32 %s12, 1
      %s20 = ssub.s32 %s12, %s19
      %p21 = scmp.eq.s32.totalorder %s20, 0
      %s23 = sadd.s32 %s22, 1
      %s24 = scalar_select %p21, %s22, %s23
      %p27 = pneg %p21
      %p28 = scmp.eq.s32.totalorder %s12, 1
      %p29 = por %p27, %p28
      %p30 = scmp.ne.s32.totalorder %s22, %s25
      %p31 = scmp.eq.s32.totalorder %s12, 0
      %p32 = por %p30, %p31
      %p33 = scmp.ne.s32.totalorder %s22, %s25
      %p34 = scmp.eq.s32.totalorder %s17, 1
      %p35 = por %p33, %p34
      %p36 = scmp.ne.s32.totalorder %s25, %s26
      %p37 = scmp.eq.s32.totalorder %s17, 0
      %p38 = por %p36, %p37
      %p39 = scmp.ne.s32.totalorder %s25, %s26
      %p40 = scmp.eq.s32.totalorder %s18, 1
      %p41 = por %p39, %p40
      %p43 = scmp.ne.s32.totalorder %s26, %s42
      %p44 = scmp.eq.s32.totalorder %s18, 0
      %p45 = por %p43, %p44
      %s47 = sadd.s32 %s46, 1
      %p50 = scmp.eq.s32.totalorder %s12, 1
      %p51 = scmp.ne.s32.totalorder %s46, %s48
      %p52 = scmp.eq.s32.totalorder %s12, 0
      %p53 = por %p51, %p52
      %p54 = scmp.ne.s32.totalorder %s46, %s48
      %p55 = scmp.eq.s32.totalorder %s17, 1
      %p56 = por %p54, %p55
      %p57 = scmp.ne.s32.totalorder %s48, %s49
      %p58 = scmp.eq.s32.totalorder %s17, 0
      %p59 = por %p57, %p58
      %p60 = scmp.ne.s32.totalorder %s48, %s49
      %p61 = scmp.eq.s32.totalorder %s18, 1
      %p62 = por %p60, %p61
      %p64 = scmp.ne.s32.totalorder %s49, %s63
      %p65 = scmp.eq.s32.totalorder %s18, 0
      %p66 = por %p64, %p65
      %s68 = sadd.s32 %s67, 1
      %p71 = scmp.eq.s32.totalorder %s12, 1
      %p72 = scmp.ne.s32.totalorder %s67, %s69
      %p73 = scmp.eq.s32.totalorder %s12, 0
      %p74 = por %p72, %p73
      %p75 = scmp.ne.s32.totalorder %s67, %s69
      %p76 = scmp.eq.s32.totalorder %s17, 1
      %p77 = por %p75, %p76
      %p78 = scmp.ne.s32.totalorder %s69, %s70
      %p79 = scmp.eq.s32.totalorder %s17, 0
      %p80 = por %p78, %p79
      %p81 = scmp.ne.s32.totalorder %s69, %s70
      %p82 = scmp.eq.s32.totalorder %s18, 1
      %p83 = por %p81, %p82
      %p85 = scmp.ne.s32.totalorder %s70, %s84
      %p86 = scmp.eq.s32.totalorder %s18, 0
      %p87 = por %p85, %p86
      %s88 = ssub.s32 %s12, %s19
      %p89 = scmp.eq.s32.totalorder %s88, 0
      %s91 = sadd.s32 %s90, 1
      %s92 = scalar_select %p89, %s90, %s91
      %p95 = pneg %p89
      %p96 = scmp.eq.s32.totalorder %s12, 1
      %p97 = por %p95, %p96
      %p98 = scmp.ne.s32.totalorder %s90, %s93
      %p99 = scmp.eq.s32.totalorder %s12, 0
      %p100 = por %p98, %p99
      %p101 = scmp.ne.s32.totalorder %s90, %s93
      %p102 = scmp.eq.s32.totalorder %s17, 1
      %p103 = por %p101, %p102
      %p104 = scmp.ne.s32.totalorder %s93, %s94
      %p105 = scmp.eq.s32.totalorder %s17, 0
      %p106 = por %p104, %p105
      %p107 = scmp.ne.s32.totalorder %s93, %s94
      %p108 = scmp.eq.s32.totalorder %s18, 1
      %p109 = por %p107, %p108
      %p111 = scmp.ne.s32.totalorder %s94, %s110
      %p112 = scmp.eq.s32.totalorder %s18, 0
      %p113 = por %p111, %p112
      %p114 = scmp.le.s32.totalorder 1, %s12
      %p115 = scmp.lt.s32.totalorder %s12, 3
      %p116 = pnand %p114, %p115
      %p117 = pneg %p116
      // Predicated region
      $region9: #{tpu_custom_call.1} parent=5 // pred_check
        _
      $region10: #{tpu_custom_call.1} parent=5 // pred_check_branch
        %119 = sbr.rel (%p116) target = $region12
      $region11: #{tpu_custom_call.1} parent=5 // pred_region
        %s120 = ssub.s32 %s12, 1
        // Predicated region
        $region13: #{tpu_custom_call.1} parent=11 // pred_check
          %p121 = pneg %p59
        $region14: #{tpu_custom_call.1} parent=11 // pred_check_branch
          %123 = sbr.rel (%p121) target = $region16
        $region15: #{tpu_custom_call.1} parent=11 // pred_region
          _
        $region16: #{tpu_custom_call.1} parent=11 // pred_fallthru
          _
        // Predicated region
        $region17: #{tpu_custom_call.1} parent=11 // pred_check
          %p124 = pneg %p80
        $region18: #{tpu_custom_call.1} parent=11 // pred_check_branch
          %126 = sbr.rel (%p124) target = $region20
        $region19: #{tpu_custom_call.1} parent=11 // pred_region
          _
        $region20: #{tpu_custom_call.1} parent=11 // pred_fallthru
          _
      $region12: #{tpu_custom_call.1} parent=5 // pred_fallthru
        _
      %p127 = scmp.lt.s32.totalorder %s12, 2
      // Predicated region
      $region21: #{tpu_custom_call.1} parent=5 // pred_check
        %p128 = pneg %p127
      $region22: #{tpu_custom_call.1} parent=5 // pred_check_branch
        %130 = sbr.rel (%p128) target = $region24
      $region23: #{tpu_custom_call.1} parent=5 // pred_region
        // Predicated region
        $region25: #{tpu_custom_call.1} parent=23 // pred_check
          %p131 = pneg %p32
        $region26: #{tpu_custom_call.1} parent=23 // pred_check_branch
          %133 = sbr.rel (%p131) target = $region28
        $region27: #{tpu_custom_call.1} parent=23 // pred_region
          %p134 = scmp.lt.s32.totalorder %s12, 1
          %s135 = scalar_select %p134, %s12, 1
          %s136 = smul.addr %s135, 8
          %s137 = scalar_lea.vmem %s0, %s136
        $region28: #{tpu_custom_call.1} parent=23 // pred_fallthru
          _
      $region24: #{tpu_custom_call.1} parent=5 // pred_fallthru
        _
      %p138 = scmp.le.s32.totalorder 1, %s12
      %p139 = scmp.lt.s32.totalorder %s12, 3
      %p140 = pnand %p138, %p139
      %p141 = pneg %p140
      // Predicated region
      $region29: #{tpu_custom_call.1} parent=5 // pred_check
        _
      $region30: #{tpu_custom_call.1} parent=5 // pred_check_branch
        %143 = sbr.rel (%p140) target = $region32
      $region31: #{tpu_custom_call.1} parent=5 // pred_region
        %s144 = ssub.s32 %s12, 1
        %p145 = scmp.lt.s32.totalorder %s17, 1
        %s146 = scalar_select %p145, %s17, 1
        %s147 = smul.addr %s146, 8
        %s148 = scalar_lea.vmem %s0, %s147
        %p149 = pneg %p38
        %p150 = pneg %p35
        %p151 = pneg %p59
        %p152 = pneg %p56
        %p153 = pneg %p80
        %p154 = pneg %p77
        %p155 = pneg %p106
        %p156 = pneg %p103
        %s157 = sand.u32 %s93, 1
        %s158 = scalar_lea.sflag [#allocation4], %s157
        %s159 = sand.u32 %s93, 1
        %s160 = smul.addr %s159, 448
        %s161 = scalar_lea.vmem [#allocation3], %s160
        %p162 = scmp.lt.s32.totalorder %s17, 1
        %s163 = scalar_select %p162, %s17, 1
        %s164 = smul.addr %s163, 8
        %s165 = scalar_lea.vmem %s0, %s164
        %v166 = vld [vmem:[%s165] sm:$0xff]
        %v167 = vld [vmem:[%s2] sm:$0xff]
        %v168 = vld [vmem:[%s2 + $0x8] sm:$0xff]
        %vm169 = vcmask 64512
        %v171 = vsel %vm169, %v166, 0
        %173 = vmatprep.subr.mxu0 %v168
        %174 = vmatpush1.msra.mxu0 %v167
        %175 = vmatprep.subr.mxu0 0.0
        %176 = vmatpush1.msra.mxu0 0.0
        %177 = vmatprep.subr.mxu0 0.0
        %178 = vmatpush1.msra.mxu0 0.0
        %179 = vmatprep.subr.mxu0 0.0
        %180 = vmatpush1.msra.mxu0 0.0
        %181 = vmatprep.subr.mxu0 0.0
        %182 = vmatpush1.msra.mxu0 0.0
        %183 = vmatprep.subr.mxu0 0.0
        %184 = vmatpush1.msra.mxu0 0.0
        %185 = vmatprep.subr.mxu0 0.0
        %186 = vmatpush1.msra.mxu0 0.0
        %187 = vmatprep.subr.mxu0 0.0
        %188 = vmatpush1.msra.mxu0 0.0
        %189 = vmatprep.subr.mxu0 0.0
        %190 = vmatpush1.msra.mxu0 0.0
        %191 = vmatprep.subr.mxu0 0.0
        %192 = vmatpush1.msra.mxu0 0.0
        %193 = vmatprep.subr.mxu0 0.0
        %194 = vmatpush1.msra.mxu0 0.0
        %195 = vmatprep.subr.mxu0 0.0
        %196 = vmatpush1.msra.mxu0 0.0
        %197 = vmatprep.subr.mxu0 0.0
        %198 = vmatpush1.msra.mxu0 0.0
        %199 = vmatprep.subr.mxu0 0.0
        %200 = vmatpush1.msra.mxu0 0.0
        %201 = vmatprep.subr.mxu0 0.0
        %202 = vmatpush1.msra.mxu0 0.0
        %203 = vmatprep.subr.mxu0 0.0
        %204 = vmatpush1.msra.mxu0 0.0
        %205 = vmatprep.subr.mxu0 0.0
        %206 = vmatpush1.msra.mxu0 0.0
        %207 = vmatprep.subr.mxu0 0.0
        %208 = vmatpush1.msra.mxu0 0.0
        %209 = vmatprep.subr.mxu0 0.0
        %210 = vmatpush1.msra.mxu0 0.0
        %211 = vmatprep.subr.mxu0 0.0
        %212 = vmatpush1.msra.mxu0 0.0
        %213 = vmatprep.subr.mxu0 0.0
        %214 = vmatpush1.msra.mxu0 0.0
        %215 = vmatprep.subr.mxu0 0.0
        %216 = vmatpush1.msra.mxu0 0.0
        %217 = vmatprep.subr.mxu0 0.0
        %218 = vmatpush1.msra.mxu0 0.0
        %219 = vmatprep.subr.mxu0 0.0
        %220 = vmatpush1.msra.mxu0 0.0
        %221 = vmatprep.subr.mxu0 0.0
        %222 = vmatpush1.msra.mxu0 0.0
        %223 = vmatprep.subr.mxu0 0.0
        %224 = vmatpush1.msra.mxu0 0.0
        %225 = vmatprep.subr.mxu0 0.0
        %226 = vmatpush1.msra.mxu0 0.0
        %227 = vmatprep.subr.mxu0 0.0
        %228 = vmatpush1.msra.mxu0 0.0
        %229 = vmatprep.subr.mxu0 0.0
        %230 = vmatpush1.msra.mxu0 0.0
        %231 = vmatprep.subr.mxu0 0.0
        %232 = vmatpush1.msra.mxu0 0.0
        %233 = vmatprep.subr.mxu0 0.0
        %234 = vmatpush1.msra.mxu0 0.0
        %235 = vmatprep.subr.mxu0 0.0
        %236 = vmatpush1.msra.mxu0 0.0
        %237 = vmatprep.mubr.f32.mxu0 0.0
        %238 = vmatmul.mubr.f32.gmra.mrb[0].mxu0 %v171
        %v239 = vpop.f32.mrb[0].mxu0
        %v240 = vadd.f32 0.0, %v239
        %v241 = vpop.f32.mrb[0].mxu0
        %v242 = vadd.f32 0.0, %v241
        %243 = vdwg.mxu0
        %244 = vst [vmem:[#allocation2] sm:$0xff] %v240
        %vm245 = vcmask 785408
        %246 = vst.msk [vmem:[#allocation2 + $0x8] sm:$0xff] %vm245, %v242
        %s247 = smul.u32 0, 2
        %s248 = smul.addr %s247, 8
        %s249 = scalar_lea.vmem [#allocation2], %s248
        %v250 = vld [vmem:[%s249] sm:$0xff]
        %v251 = vld [vmem:[%s249 + $0x8] sm:$0xff]
        %v252 = vld [vmem:[%s1] sm:$0xff]
        %v253 = vld [vmem:[%s1 + $0x8] sm:$0xff]
        %v254 = vld [vmem:[%s1 + $0x10] sm:$0xff]
        %v255 = vld [vmem:[%s1 + $0x18] sm:$0xff]
        %v256 = vld [vmem:[%s1 + $0x20] sm:$0xff]
        %v257 = vld [vmem:[%s1 + $0x28] sm:$0xff]
        %v258 = vld [vmem:[%s1 + $0x30] sm:$0xff]
        %v259 = vld [vmem:[%s1 + $0x38] sm:$0xff]
        %v260 = vld [vmem:[%s1 + $0x40] sm:$0xff]
        %v261 = vld [vmem:[%s1 + $0x48] sm:$0xff]
        %v262 = vld [vmem:[%s1 + $0x50] sm:$0xff]
        %v263 = vld [vmem:[%s1 + $0x58] sm:$0xff]
        %v264 = vld [vmem:[%s1 + $0x60] sm:$0xff]
        %v265 = vld [vmem:[%s1 + $0x68] sm:$0xff]
        %v266 = vld [vmem:[%s1 + $0x70] sm:$0xff]
        %v267 = vld [vmem:[%s1 + $0x78] sm:$0xff]
        %v268 = vld [vmem:[%s1 + $0x80] sm:$0xff]
        %v269 = vld [vmem:[%s1 + $0x88] sm:$0xff]
        %v270 = vld [vmem:[%s1 + $0x90] sm:$0xff]
        %v271 = vld [vmem:[%s1 + $0x98] sm:$0xff]
        %v272 = vld [vmem:[%s1 + $0xa0] sm:$0xff]
        %v273 = vld [vmem:[%s1 + $0xa8] sm:$0xff]
        %v274 = vld [vmem:[%s1 + $0xb0] sm:$0xff]
        %v275 = vld [vmem:[%s1 + $0xb8] sm:$0xff]
        %v276 = vld [vmem:[%s1 + $0xc0] sm:$0xff]
        %v277 = vld [vmem:[%s1 + $0xc8] sm:$0xff]
        %v278 = vld [vmem:[%s1 + $0xd0] sm:$0xff]
        %v279 = vld [vmem:[%s1 + $0xd8] sm:$0xff]
        %v281 = vsel %vm169, %v252, 0
        %v284 = vsel %vm169, %v253, 0
        %v287 = vsel %vm169, %v254, 0
        %v290 = vsel %vm169, %v255, 0
        %v293 = vsel %vm169, %v256, 0
        %v296 = vsel %vm169, %v257, 0
        %v299 = vsel %vm169, %v258, 0
        %v302 = vsel %vm169, %v259, 0
        %v305 = vsel %vm169, %v260, 0
        %v308 = vsel %vm169, %v261, 0
        %v311 = vsel %vm169, %v262, 0
        %v314 = vsel %vm169, %v263, 0
        %v317 = vsel %vm169, %v264, 0
        %v320 = vsel %vm169, %v265, 0
        %v323 = vsel %vm169, %v266, 0
        %v326 = vsel %vm169, %v267, 0
        %v329 = vsel %vm169, %v268, 0
        %v332 = vsel %vm169, %v269, 0
        %v335 = vsel %vm169, %v270, 0
        %v338 = vsel %vm169, %v271, 0
        %v341 = vsel %vm169, %v272, 0
        %v344 = vsel %vm169, %v273, 0
        %v347 = vsel %vm169, %v274, 0
        %v350 = vsel %vm169, %v275, 0
        %v353 = vsel %vm169, %v276, 0
        %v356 = vsel %vm169, %v277, 0
        %v359 = vsel %vm169, %v278, 0
        %v362 = vsel %vm169, %v279, 0
        %364 = vmatprep.subr.mxu0 %v251
        %365 = vmatpush1.msra.mxu0 %v250
        %366 = vmatprep.subr.mxu0 0.0
        %367 = vmatpush1.msra.mxu0 0.0
        %368 = vmatprep.subr.mxu0 0.0
        %369 = vmatpush1.msra.mxu0 0.0
        %370 = vmatprep.subr.mxu0 0.0
        %371 = vmatpush1.msra.mxu0 0.0
        %372 = vmatprep.subr.mxu0 0.0
        %373 = vmatpush1.msra.mxu0 0.0
        %374 = vmatprep.subr.mxu0 0.0
        %375 = vmatpush1.msra.mxu0 0.0
        %376 = vmatprep.subr.mxu0 0.0
        %377 = vmatpush1.msra.mxu0 0.0
        %378 = vmatprep.subr.mxu0 0.0
        %379 = vmatpush1.msra.mxu0 0.0
        %380 = vmatprep.subr.mxu0 0.0
        %381 = vmatpush1.msra.mxu0 0.0
        %382 = vmatprep.subr.mxu0 0.0
        %383 = vmatpush1.msra.mxu0 0.0
        %384 = vmatprep.subr.mxu0 0.0
        %385 = vmatpush1.msra.mxu0 0.0
        %386 = vmatprep.subr.mxu0 0.0
        %387 = vmatpush1.msra.mxu0 0.0
        %388 = vmatprep.subr.mxu0 0.0
        %389 = vmatpush1.msra.mxu0 0.0
        %390 = vmatprep.subr.mxu0 0.0
        %391 = vmatpush1.msra.mxu0 0.0
        %392 = vmatprep.subr.mxu0 0.0
        %393 = vmatpush1.msra.mxu0 0.0
        %394 = vmatprep.subr.mxu0 0.0
        %395 = vmatpush1.msra.mxu0 0.0
        %396 = vmatprep.subr.mxu0 0.0
        %397 = vmatpush1.msra.mxu0 0.0
        %398 = vmatprep.subr.mxu0 0.0
        %399 = vmatpush1.msra.mxu0 0.0
        %400 = vmatprep.subr.mxu0 0.0
        %401 = vmatpush1.msra.mxu0 0.0
        %402 = vmatprep.subr.mxu0 0.0
        %403 = vmatpush1.msra.mxu0 0.0
        %404 = vmatprep.subr.mxu0 0.0
        %405 = vmatpush1.msra.mxu0 0.0
        %406 = vmatprep.subr.mxu0 0.0
        %407 = vmatpush1.msra.mxu0 0.0
        %408 = vmatprep.subr.mxu0 0.0
        %409 = vmatpush1.msra.mxu0 0.0
        %410 = vmatprep.subr.mxu0 0.0
        %411 = vmatpush1.msra.mxu0 0.0
        %412 = vmatprep.subr.mxu0 0.0
        %413 = vmatpush1.msra.mxu0 0.0
        %414 = vmatprep.subr.mxu0 0.0
        %415 = vmatpush1.msra.mxu0 0.0
        %416 = vmatprep.subr.mxu0 0.0
        %417 = vmatpush1.msra.mxu0 0.0
        %418 = vmatprep.subr.mxu0 0.0
        %419 = vmatpush1.msra.mxu0 0.0
        %420 = vmatprep.subr.mxu0 0.0
        %421 = vmatpush1.msra.mxu0 0.0
        %422 = vmatprep.subr.mxu0 0.0
        %423 = vmatpush1.msra.mxu0 0.0
        %424 = vmatprep.subr.mxu0 0.0
        %425 = vmatpush1.msra.mxu0 0.0
        %426 = vmatprep.subr.mxu0 0.0
        %427 = vmatpush1.msra.mxu0 0.0
        %428 = vmatprep.mubr.f32.mxu0 0.0
        %429 = vmatmul.mubr.f32.gmra.mrb[0].mxu0 %v281
        %v430 = vpop.f32.mrb[0].mxu0
        %v431 = vadd.f32 0.0, %v430
        %v432 = vpop.f32.mrb[0].mxu0
        %v433 = vadd.f32 0.0, %v432
        %434 = vmatprep.mubr.f32.mxu0 0.0
        %435 = vmatmul.mubr.f32.gmra.mrb[0].mxu0 %v284
        %v436 = vpop.f32.mrb[0].mxu0
        %v437 = vadd.f32 0.0, %v436
        %v438 = vpop.f32.mrb[0].mxu0
        %v439 = vadd.f32 0.0, %v438
        %440 = vmatprep.mubr.f32.mxu0 0.0
        %441 = vmatmul.mubr.f32.gmra.mrb[0].mxu0 %v287
        %v442 = vpop.f32.mrb[0].mxu0
        %v443 = vadd.f32 0.0, %v442
        %v444 = vpop.f32.mrb[0].mxu0
        %v445 = vadd.f32 0.0, %v444
        %446 = vmatprep.mubr.f32.mxu0 0.0
        %447 = vmatmul.mubr.f32.gmra.mrb[0].mxu0 %v290
        %v448 = vpop.f32.mrb[0].mxu0
        %v449 = vadd.f32 0.0, %v448
        %v450 = vpop.f32.mrb[0].mxu0
        %v451 = vadd.f32 0.0, %v450
        %452 = vmatprep.mubr.f32.mxu0 0.0
        %453 = vmatmul.mubr.f32.gmra.mrb[0].mxu0 %v293
        %v454 = vpop.f32.mrb[0].mxu0
        %v455 = vadd.f32 0.0, %v454
        %v456 = vpop.f32.mrb[0].mxu0
        %v457 = vadd.f32 0.0, %v456
        %458 = vmatprep.mubr.f32.mxu0 0.0
        %459 = vmatmul.mubr.f32.gmra.mrb[0].mxu0 %v296
        %v460 = vpop.f32.mrb[0].mxu0
        %v461 = vadd.f32 0.0, %v460
        %v462 = vpop.f32.mrb[0].mxu0
        %v463 = vadd.f32 0.0, %v462
        %464 = vmatprep.mubr.f32.mxu0 0.0
        %465 = vmatmul.mubr.f32.gmra.mrb[0].mxu0 %v299
        %v466 = vpop.f32.mrb[0].mxu0
        %v467 = vadd.f32 0.0, %v466
        %v468 = vpop.f32.mrb[0].mxu0
        %v469 = vadd.f32 0.0, %v468
        %470 = vmatprep.mubr.f32.mxu0 0.0
        %471 = vmatmul.mubr.f32.gmra.mrb[0].mxu0 %v302
        %v472 = vpop.f32.mrb[0].mxu0
        %v473 = vadd.f32 0.0, %v472
        %v474 = vpop.f32.mrb[0].mxu0
        %v475 = vadd.f32 0.0, %v474
        %476 = vmatprep.mubr.f32.mxu0 0.0
        %477 = vmatmul.mubr.f32.gmra.mrb[0].mxu0 %v305
        %v478 = vpop.f32.mrb[0].mxu0
        %v479 = vadd.f32 0.0, %v478
        %v480 = vpop.f32.mrb[0].mxu0
        %v481 = vadd.f32 0.0, %v480
        %482 = vmatprep.mubr.f32.mxu0 0.0
        %483 = vmatmul.mubr.f32.gmra.mrb[0].mxu0 %v308
        %v484 = vpop.f32.mrb[0].mxu0
        %v485 = vadd.f32 0.0, %v484
        %v486 = vpop.f32.mrb[0].mxu0
        %v487 = vadd.f32 0.0, %v486
        %488 = vmatprep.mubr.f32.mxu0 0.0
        %489 = vmatmul.mubr.f32.gmra.mrb[0].mxu0 %v311
        %v490 = vpop.f32.mrb[0].mxu0
        %v491 = vadd.f32 0.0, %v490
        %v492 = vpop.f32.mrb[0].mxu0
        %v493 = vadd.f32 0.0, %v492
        %494 = vmatprep.mubr.f32.mxu0 0.0
        %495 = vmatmul.mubr.f32.gmra.mrb[0].mxu0 %v314
        %v496 = vpop.f32.mrb[0].mxu0
        %v497 = vadd.f32 0.0, %v496
        %v498 = vpop.f32.mrb[0].mxu0
        %v499 = vadd.f32 0.0, %v498
        %500 = vmatprep.mubr.f32.mxu0 0.0
        %501 = vmatmul.mubr.f32.gmra.mrb[0].mxu0 %v317
        %v502 = vpop.f32.mrb[0].mxu0
        %v503 = vadd.f32 0.0, %v502
        %v504 = vpop.f32.mrb[0].mxu0
        %v505 = vadd.f32 0.0, %v504
        %506 = vmatprep.mubr.f32.mxu0 0.0
        %507 = vmatmul.mubr.f32.gmra.mrb[0].mxu0 %v320
        %v508 = vpop.f32.mrb[0].mxu0
        %v509 = vadd.f32 0.0, %v508
        %v510 = vpop.f32.mrb[0].mxu0
        %v511 = vadd.f32 0.0, %v510
        %512 = vmatprep.mubr.f32.mxu0 0.0
        %513 = vmatmul.mubr.f32.gmra.mrb[0].mxu0 %v323
        %v514 = vpop.f32.mrb[0].mxu0
        %v515 = vadd.f32 0.0, %v514
        %v516 = vpop.f32.mrb[0].mxu0
        %v517 = vadd.f32 0.0, %v516
        %518 = vmatprep.mubr.f32.mxu0 0.0
        %519 = vmatmul.mubr.f32.gmra.mrb[0].mxu0 %v326
        %v520 = vpop.f32.mrb[0].mxu0
        %v521 = vadd.f32 0.0, %v520
        %v522 = vpop.f32.mrb[0].mxu0
        %v523 = vadd.f32 0.0, %v522
        %524 = vmatprep.mubr.f32.mxu0 0.0
        %525 = vmatmul.mubr.f32.gmra.mrb[0].mxu0 %v329
        %v526 = vpop.f32.mrb[0].mxu0
        %v527 = vadd.f32 0.0, %v526
        %v528 = vpop.f32.mrb[0].mxu0
        %v529 = vadd.f32 0.0, %v528
        %530 = vmatprep.mubr.f32.mxu0 0.0
        %531 = vmatmul.mubr.f32.gmra.mrb[0].mxu0 %v332
        %v532 = vpop.f32.mrb[0].mxu0
        %v533 = vadd.f32 0.0, %v532
        %v534 = vpop.f32.mrb[0].mxu0
        %v535 = vadd.f32 0.0, %v534
        %536 = vmatprep.mubr.f32.mxu0 0.0
        %537 = vmatmul.mubr.f32.gmra.mrb[0].mxu0 %v335
        %v538 = vpop.f32.mrb[0].mxu0
        %v539 = vadd.f32 0.0, %v538
        %v540 = vpop.f32.mrb[0].mxu0
        %v541 = vadd.f32 0.0, %v540
        %542 = vmatprep.mubr.f32.mxu0 0.0
        %543 = vmatmul.mubr.f32.gmra.mrb[0].mxu0 %v338
        %v544 = vpop.f32.mrb[0].mxu0
        %v545 = vadd.f32 0.0, %v544
        %v546 = vpop.f32.mrb[0].mxu0
        %v547 = vadd.f32 0.0, %v546
        %548 = vmatprep.mubr.f32.mxu0 0.0
        %549 = vmatmul.mubr.f32.gmra.mrb[0].mxu0 %v341
        %v550 = vpop.f32.mrb[0].mxu0
        %v551 = vadd.f32 0.0, %v550
        %v552 = vpop.f32.mrb[0].mxu0
        %v553 = vadd.f32 0.0, %v552
        %554 = vmatprep.mubr.f32.mxu0 0.0
        %555 = vmatmul.mubr.f32.gmra.mrb[0].mxu0 %v344
        %v556 = vpop.f32.mrb[0].mxu0
        %v557 = vadd.f32 0.0, %v556
        %v558 = vpop.f32.mrb[0].mxu0
        %v559 = vadd.f32 0.0, %v558
        %560 = vmatprep.mubr.f32.mxu0 0.0
        %561 = vmatmul.mubr.f32.gmra.mrb[0].mxu0 %v347
        %v562 = vpop.f32.mrb[0].mxu0
        %v563 = vadd.f32 0.0, %v562
        %v564 = vpop.f32.mrb[0].mxu0
        %v565 = vadd.f32 0.0, %v564
        %566 = vmatprep.mubr.f32.mxu0 0.0
        %567 = vmatmul.mubr.f32.gmra.mrb[0].mxu0 %v350
        %v568 = vpop.f32.mrb[0].mxu0
        %v569 = vadd.f32 0.0, %v568
        %v570 = vpop.f32.mrb[0].mxu0
        %v571 = vadd.f32 0.0, %v570
        %572 = vmatprep.mubr.f32.mxu0 0.0
        %573 = vmatmul.mubr.f32.gmra.mrb[0].mxu0 %v353
        %v574 = vpop.f32.mrb[0].mxu0
        %v575 = vadd.f32 0.0, %v574
        %v576 = vpop.f32.mrb[0].mxu0
        %v577 = vadd.f32 0.0, %v576
        %578 = vmatprep.mubr.f32.mxu0 0.0
        %579 = vmatmul.mubr.f32.gmra.mrb[0].mxu0 %v356
        %v580 = vpop.f32.mrb[0].mxu0
        %v581 = vadd.f32 0.0, %v580
        %v582 = vpop.f32.mrb[0].mxu0
        %v583 = vadd.f32 0.0, %v582
        %584 = vmatprep.mubr.f32.mxu0 0.0
        %585 = vmatmul.mubr.f32.gmra.mrb[0].mxu0 %v359
        %v586 = vpop.f32.mrb[0].mxu0
        %v587 = vadd.f32 0.0, %v586
        %v588 = vpop.f32.mrb[0].mxu0
        %v589 = vadd.f32 0.0, %v588
        %590 = vmatprep.mubr.f32.mxu0 0.0
        %591 = vmatmul.mubr.f32.gmra.mrb[0].mxu0 %v362
        %v592 = vpop.f32.mrb[0].mxu0
        %v593 = vadd.f32 0.0, %v592
        %v594 = vpop.f32.mrb[0].mxu0
        %v595 = vadd.f32 0.0, %v594
        %596 = vdwg.mxu0
        %597 = vst [vmem:[%s161] sm:$0xff] %v431
        %598 = vst.msk [vmem:[%s161 + $0x8] sm:$0xff] %vm245, %v433
        %599 = vst [vmem:[%s161 + $0x10] sm:$0xff] %v437
        %600 = vst.msk [vmem:[%s161 + $0x18] sm:$0xff] %vm245, %v439
        %601 = vst [vmem:[%s161 + $0x20] sm:$0xff] %v443
        %602 = vst.msk [vmem:[%s161 + $0x28] sm:$0xff] %vm245, %v445
        %603 = vst [vmem:[%s161 + $0x30] sm:$0xff] %v449
        %604 = vst.msk [vmem:[%s161 + $0x38] sm:$0xff] %vm245, %v451
        %605 = vst [vmem:[%s161 + $0x40] sm:$0xff] %v455
        %606 = vst.msk [vmem:[%s161 + $0x48] sm:$0xff] %vm245, %v457
        %607 = vst [vmem:[%s161 + $0x50] sm:$0xff] %v461
        %608 = vst.msk [vmem:[%s161 + $0x58] sm:$0xff] %vm245, %v463
        %609 = vst [vmem:[%s161 + $0x60] sm:$0xff] %v467
        %610 = vst.msk [vmem:[%s161 + $0x68] sm:$0xff] %vm245, %v469
        %611 = vst [vmem:[%s161 + $0x70] sm:$0xff] %v473
        %612 = vst.msk [vmem:[%s161 + $0x78] sm:$0xff] %vm245, %v475
        %613 = vst [vmem:[%s161 + $0x80] sm:$0xff] %v479
        %614 = vst.msk [vmem:[%s161 + $0x88] sm:$0xff] %vm245, %v481
        %615 = vst [vmem:[%s161 + $0x90] sm:$0xff] %v485
        %616 = vst.msk [vmem:[%s161 + $0x98] sm:$0xff] %vm245, %v487
        %617 = vst [vmem:[%s161 + $0xa0] sm:$0xff] %v491
        %618 = vst.msk [vmem:[%s161 + $0xa8] sm:$0xff] %vm245, %v493
        %619 = vst [vmem:[%s161 + $0xb0] sm:$0xff] %v497
        %620 = vst.msk [vmem:[%s161 + $0xb8] sm:$0xff] %vm245, %v499
        %621 = vst [vmem:[%s161 + $0xc0] sm:$0xff] %v503
        %622 = vst.msk [vmem:[%s161 + $0xc8] sm:$0xff] %vm245, %v505
        %623 = vst [vmem:[%s161 + $0xd0] sm:$0xff] %v509
        %624 = vst.msk [vmem:[%s161 + $0xd8] sm:$0xff] %vm245, %v511
        %625 = vst [vmem:[%s161 + $0xe0] sm:$0xff] %v515
        %626 = vst.msk [vmem:[%s161 + $0xe8] sm:$0xff] %vm245, %v517
        %627 = vst [vmem:[%s161 + $0xf0] sm:$0xff] %v521
        %628 = vst.msk [vmem:[%s161 + $0xf8] sm:$0xff] %vm245, %v523
        %629 = vst [vmem:[%s161 + $0x100] sm:$0xff] %v527
        %630 = vst.msk [vmem:[%s161 + $0x108] sm:$0xff] %vm245, %v529
        %631 = vst [vmem:[%s161 + $0x110] sm:$0xff] %v533
        %632 = vst.msk [vmem:[%s161 + $0x118] sm:$0xff] %vm245, %v535
        %633 = vst [vmem:[%s161 + $0x120] sm:$0xff] %v539
        %634 = vst.msk [vmem:[%s161 + $0x128] sm:$0xff] %vm245, %v541
        %635 = vst [vmem:[%s161 + $0x130] sm:$0xff] %v545
        %636 = vst.msk [vmem:[%s161 + $0x138] sm:$0xff] %vm245, %v547
        %637 = vst [vmem:[%s161 + $0x140] sm:$0xff] %v551
        %638 = vst.msk [vmem:[%s161 + $0x148] sm:$0xff] %vm245, %v553
        %639 = vst [vmem:[%s161 + $0x150] sm:$0xff] %v557
        %640 = vst.msk [vmem:[%s161 + $0x158] sm:$0xff] %vm245, %v559
        %641 = vst [vmem:[%s161 + $0x160] sm:$0xff] %v563
        %642 = vst.msk [vmem:[%s161 + $0x168] sm:$0xff] %vm245, %v565
        %643 = vst [vmem:[%s161 + $0x170] sm:$0xff] %v569
        %644 = vst.msk [vmem:[%s161 + $0x178] sm:$0xff] %vm245, %v571
        %645 = vst [vmem:[%s161 + $0x180] sm:$0xff] %v575
        %646 = vst.msk [vmem:[%s161 + $0x188] sm:$0xff] %vm245, %v577
        %647 = vst [vmem:[%s161 + $0x190] sm:$0xff] %v581
        %648 = vst.msk [vmem:[%s161 + $0x198] sm:$0xff] %vm245, %v583
        %649 = vst [vmem:[%s161 + $0x1a0] sm:$0xff] %v587
        %650 = vst.msk [vmem:[%s161 + $0x1a8] sm:$0xff] %vm245, %v589
        %651 = vst [vmem:[%s161 + $0x1b0] sm:$0xff] %v593
        %652 = vst.msk [vmem:[%s161 + $0x1b8] sm:$0xff] %vm245, %v595
        %s653 = sand.u32 %s93, 1
        %s654 = scalar_lea.sflag [#allocation4], %s653
        %s655 = sand.u32 %s93, 1
        %s656 = smul.addr %s655, 448
        %s657 = scalar_lea.vmem [#allocation3], %s656
        // Predicated region
        $region33: #{tpu_custom_call.1} parent=31 // pred_check
          %p658 = pneg %p103
        $region34: #{tpu_custom_call.1} parent=31 // pred_check_branch
          %660 = sbr.rel (%p658) target = $region36
        $region35: #{tpu_custom_call.1} parent=31 // pred_region
          %s662 = ssub.s32 7168, 7168
          %663 = vsyncadd %s654, %s662
          %s664 = smul.addr %s17, 56
          %s665 = smul.addr %s664, 128
          %s666 = scalar_lea.hbm %s3, %s665
          %s667 = sshll.u32 %s657, 4
          %s668 = int_to_ptr.vmem [resolvable:$true] %s667
          %673 = dma.vmem_to_hbm [thread:$0]  %s668, 7168, %s666, %s654, 256, 256, 16
        $region36: #{tpu_custom_call.1} parent=31 // pred_fallthru
          _
      $region32: #{tpu_custom_call.1} parent=5 // pred_fallthru
        _
      %p674 = scmp.le.s32.totalorder 2, %s12
      // Predicated region
      $region37: #{tpu_custom_call.1} parent=5 // pred_check
        %p675 = pneg %p674
      $region38: #{tpu_custom_call.1} parent=5 // pred_check_branch
        %677 = sbr.rel (%p675) target = $region40
      $region39: #{tpu_custom_call.1} parent=5 // pred_region
        %s678 = ssub.s32 %s12, 2
        // Predicated region
        $region41: #{tpu_custom_call.1} parent=39 // pred_check
          %p679 = pneg %p109
        $region42: #{tpu_custom_call.1} parent=39 // pred_check_branch
          %681 = sbr.rel (%p679) target = $region44
        $region43: #{tpu_custom_call.1} parent=39 // pred_region
          %s682 = sand.u32 %s94, 1
          %s683 = scalar_lea.sflag [#allocation4], %s682
          %s684 = sand.u32 %s94, 1
          %s685 = smul.addr %s684, 448
          %s686 = scalar_lea.vmem [#allocation3], %s685
          %687 = dma.done %s683, 7168
        $region44: #{tpu_custom_call.1} parent=39 // pred_fallthru
          _
      $region40: #{tpu_custom_call.1} parent=5 // pred_fallthru
        _
    $region6: #{tpu_custom_call.1} parent=1 // loop_footer
      %s16 = sadd.s32 1, %s12
    $region7: #{tpu_custom_call.1} parent=1 // loop_footer_branch
      %11 = sbr.rel target = $region3
    $region8: #{tpu_custom_call.1} parent=1 // loop_exit
      _
    %688 = vsyncpa [#allocation4], 1
    %s689 = scalar_lea.sflag [#allocation4], 1
    %690 = vsyncpa %s689, 1

</llo_original>
